<compile_context>
chip_gen: v7x
topology: tpu7x:2x2x1
jax: 0.10.0
libtpu: 0.0.40
codegen_flags: <defaults>
</compile_context>

<pallas_src>
import functools

import jax
import jax.numpy as jnp
from jax import lax
from jax.experimental import pallas as pl
from jax.experimental.pallas import tpu as pltpu

EPS = 1e-8  # Dice(eps=1e-08)

# Row indices inside the packed [8, H] parameter slab.
_B1, _ALPHA, _BETA, _GAMMA, _BNB, _W2, _B2 = 0, 1, 2, 3, 4, 5, 6


def _activation_unit_kernel(item1_ref, item2_ref, w1a_ref, w1c_ref, w1b_ref,
                            pp_ref, out_ref, *, matmul_dtype):
    i1 = item1_ref[...]                          # [Gt, B, E] f32
    i2 = item2_ref[...]                          # [Gt, B, E] f32
    Gt, B, E = i1.shape
    H = w1a_ref.shape[-1]
    GB = Gt * B

    pp = pp_ref[...]                             # [8, H] packed row params
    b1 = pp[_B1:_B1 + 1, :]                      # [1, H]
    alpha = pp[_ALPHA:_ALPHA + 1, :]
    beta = pp[_BETA:_BETA + 1, :]
    gamma = pp[_GAMMA:_GAMMA + 1, :]
    bn_b = pp[_BNB:_BNB + 1, :]
    w2 = pp[_W2:_W2 + 1, :]
    b2 = pp[_B2:_B2 + 1, 0:1]                    # [1, 1]

    # Only the per-group activations may need casting; the resident weights
    # were pre-cast to matmul_dtype in prepare_params.
    a1 = i1 if i1.dtype == matmul_dtype else i1.astype(matmul_dtype)
    a2 = i2 if i2.dtype == matmul_dtype else i2.astype(matmul_dtype)

    # Per-group cross = item1 @ item2.T -> [Gt, B, B].  Last-dim contraction
    # with a batch dim (flash-attention pattern): no in-kernel transpose.
    cross = jnp.einsum('gbe,gce->gbc', a1, a2,
                       preferred_element_type=jnp.float32)
    crs = cross if cross.dtype == matmul_dtype else cross.astype(matmul_dtype)

    # linear1: h = item1@w1a + cross@w1c + item2@w1b + b1, expressed as three
    # flattened (Gt*B, .) 2-D dots (leading-dim reshapes only; the lane dim is
    # untouched, so no relayout).
    h2d = (jnp.dot(a1.reshape(GB, E), w1a_ref[...],
                   preferred_element_type=jnp.float32)
           + jnp.dot(crs.reshape(GB, B), w1c_ref[...],
                     preferred_element_type=jnp.float32)
           + jnp.dot(a2.reshape(GB, E), w1b_ref[...],
                     preferred_element_type=jnp.float32))
    h = h2d.reshape(Gt, B, H) + b1                                  # [Gt, B, H]

    # Dice (dim=2): BatchNorm1d over each group's own batch axis with batch
    # statistics (biased variance, like torch's normalization), then the gated
    # blend.  Elementwise math stays f32 on every TPU generation.
    mean = jnp.mean(h, axis=1, keepdims=True)                       # [Gt, 1, H]
    var = jnp.mean((h - mean) ** 2, axis=1, keepdims=True)
    bn = (h - mean) * lax.rsqrt(var + EPS) * gamma + bn_b
    x_n = jax.nn.sigmoid(beta * bn)
    # alpha*(1-x_n)*h + x_n*h  ==  h * (alpha + x_n*(1-alpha))
    d = h * (alpha + x_n * (1.0 - alpha))                           # [Gt, B, H]

    # linear2 (H -> 1): VPU multiply + lane reduce (no 1-wide MXU matmul).
    # The [Gt, B] result is one contiguous tile per step (no trailing
    # singleton, no 1-of-128-lane masked stores).
    out_ref[...] = jnp.sum(d * w2, axis=-1) + b2                    # [Gt, B]


def prepare_params(w1, b1, w2, b2, alpha, beta, gamma, bn_beta, *, emb_size,
                   batch, matmul_dtype=jnp.float32):
    """Split linear1's weight into the concat blocks (pre-transposed to
    [in, H], pre-cast to matmul_dtype) and pack all tiny per-feature
    parameters into one [8, H] f32 slab."""
    E, B = emb_size, batch
    H = w1.shape[0]
    w1a = w1[:, :E].T.astype(matmul_dtype)            # acts on item1  [E, H]
    w1c = w1[:, E:E + B].T.astype(matmul_dtype)       # acts on cross  [B, H]
    w1b = w1[:, E + B:].T.astype(matmul_dtype)        # acts on item2  [E, H]
    pp = jnp.zeros((8, H), jnp.float32)
    pp = pp.at[_B1].set(jnp.reshape(b1, (H,)))
    pp = pp.at[_ALPHA].set(jnp.reshape(alpha, (H,)))
    pp = pp.at[_BETA].set(jnp.reshape(beta, (H,)))
    pp = pp.at[_GAMMA].set(jnp.reshape(gamma, (H,)))
    pp = pp.at[_BNB].set(jnp.reshape(bn_beta, (H,)))
    pp = pp.at[_W2].set(jnp.reshape(w2, (H,)))
    pp = pp.at[_B2, 0].set(jnp.reshape(b2, ()))
    return w1a, w1c, w1b, pp


def activation_unit(item1, item2, w1a, w1c, w1b, pp, *, block_groups=16,
                    matmul_dtype=jnp.float32):
    """Module-equivalent forward.

    item1/item2: [B, E] (single module call) or [G, B, E] for G independent
    module calls sharing the same parameters.  Groups are processed
    `block_groups` at a time per grid step (amortizes per-step pipeline
    overhead); the grid axis is parallel so it shards across TensorCores.
    Returns [B, 1] or [G, B, 1].
    """
    squeeze = item1.ndim == 2
    if squeeze:
        item1, item2 = item1[None], item2[None]
    G, B, E = item1.shape
    H = pp.shape[-1]

    Gt = min(block_groups, G)
    if Gt < G:
        # Multiple grid steps: keep the per-step (Gt, B) output tile
        # sublane-aligned (Gt a multiple of 8).
        Gt = max(8, (Gt // 8) * 8)
    num_steps = -(-G // Gt)
    G_pad = num_steps * Gt
    if G_pad != G:
        pad = G_pad - G
        item1 = jnp.concatenate(
            [item1, jnp.zeros((pad, B, E), item1.dtype)], axis=0)
        item2 = jnp.concatenate(
            [item2, jnp.zeros((pad, B, E), item2.dtype)], axis=0)

    kernel = functools.partial(_activation_unit_kernel,
                               matmul_dtype=matmul_dtype)

    out2d = pl.pallas_call(
        kernel,
        out_shape=jax.ShapeDtypeStruct((G_pad, B), jnp.float32),
        grid_spec=pltpu.PrefetchScalarGridSpec(
            num_scalar_prefetch=0,
            grid=(num_steps,),
            in_specs=[
                pl.BlockSpec((Gt, B, E), lambda s: (s, 0, 0)),   # item1 block
                pl.BlockSpec((Gt, B, E), lambda s: (s, 0, 0)),   # item2 block
                pl.BlockSpec((E, H), lambda s: (0, 0)),          # w1a (resident)
                pl.BlockSpec((B, H), lambda s: (0, 0)),          # w1c (resident)
                pl.BlockSpec((E, H), lambda s: (0, 0)),          # w1b (resident)
                pl.BlockSpec((8, H), lambda s: (0, 0)),          # packed params
            ],
            out_specs=pl.BlockSpec((Gt, B), lambda s: (s, 0)),
        ),
        # Parallel over group blocks: pipelines DMA and shards across both
        # v7x TensorCores.  Per-step VMEM is a few small tiles at these sizes;
        # if Gt/B/E/H are scaled up, set vmem_limit_bytes with headroom under
        # v7x's 64 MiB (v5e's 16 MiB scoped default is the first to bite).
        compiler_params=pltpu.CompilerParams(
            dimension_semantics=("parallel",)),
    )(item1, item2, w1a, w1c, w1b, pp)

    out = out2d[:G].reshape(G, B, 1)
    return out[0] if squeeze else out


if __name__ == "__main__":
    B, E, H = 8, 16, 36            # batch, embedding size, hidden_size=36
    in_size = 2 * E + B            # cat([item1, cross, item2], -1) width

    key = jax.random.PRNGKey(0)
    ks = jax.random.split(key, 10)
    # Deterministic synthetic parameters (shapes follow __init__).  Dice's
    # alpha/beta and the BN affine get nonzero values so every term of the
    # compute path is exercised.
    w1 = jax.random.normal(ks[0], (H, in_size), jnp.float32) * 0.1    # linear1.weight
    b1 = jax.random.normal(ks[1], (H,), jnp.float32) * 0.1            # linear1.bias
    w2 = jax.random.normal(ks[2], (1, H), jnp.float32) * 0.1          # linear2.weight
    b2 = jax.random.normal(ks[3], (1,), jnp.float32) * 0.1            # linear2.bias
    alpha = jax.random.normal(ks[4], (H,), jnp.float32) * 0.1         # Dice.alpha
    beta = jax.random.normal(ks[5], (H,), jnp.float32) * 0.1          # Dice.beta
    gamma = 1.0 + jax.random.normal(ks[6], (H,), jnp.float32) * 0.1   # bn.weight
    bn_beta = jax.random.normal(ks[7], (H,), jnp.float32) * 0.1       # bn.bias

    item1 = jax.random.normal(ks[8], (B, E), jnp.float32)
    item2 = jax.random.normal(ks[9], (B, E), jnp.float32)

    w1a, w1c, w1b, pp = prepare_params(w1, b1, w2, b2, alpha, beta, gamma,
                                       bn_beta, emb_size=E, batch=B)

    # Pure-JAX reference (mirrors the torch forward exactly).
    # TODO(synk): eval()-mode torch would use BN running stats; batch stats are
    # used here deliberately (running-stat updates are a training side effect).
    def reference(i1, i2):
        cross = i1 @ i2.T
        x = jnp.concatenate([i1, cross, i2], axis=-1)
        h = x @ w1.T + b1
        mean = jnp.mean(h, axis=0, keepdims=True)
        var = jnp.mean((h - mean) ** 2, axis=0, keepdims=True)
        bn = (h - mean) / jnp.sqrt(var + EPS) * gamma + bn_beta
        x_n = jax.nn.sigmoid(beta * bn)
        d = alpha * (1.0 - x_n) * h + x_n * h
        return d @ w2.T + b2

    # --- single module call (2-D inputs, G = 1 path) ----------------------
    out = activation_unit(item1, item2, w1a, w1c, w1b, pp)
    jax.block_until_ready(out)
    ref = reference(item1, item2)
    assert out.shape == (B, 1)
    assert jnp.allclose(out, ref, atol=1e-4, rtol=1e-3), "mismatch vs reference"

    # --- many independent module calls, group-blocked grid ----------------
    G = 64                          # block_groups=16 -> 4 parallel grid steps
    gi1 = jax.random.normal(jax.random.PRNGKey(1), (G, B, E), jnp.float32)
    gi2 = jax.random.normal(jax.random.PRNGKey(2), (G, B, E), jnp.float32)
    gout = activation_unit(gi1, gi2, w1a, w1c, w1b, pp, block_groups=16)
    jax.block_until_ready(gout)
    gref = jax.vmap(reference)(gi1, gi2)
    assert gout.shape == (G, B, 1)
    assert jnp.allclose(gout, gref, atol=1e-4, rtol=1e-3), "batched mismatch"

    print("KERNEL_OK")
</pallas_src>

<mosaic_0001>
module attributes {stable_mosaic.version = 11 : i64} {
  func.func @_activation_unit_kernel(%arg0: i32, %arg1: memref<1x8x16xf32, #tpu.memory_space<vmem>>, %arg2: memref<1x8x16xf32, #tpu.memory_space<vmem>>, %arg3: memref<16x36xf32, #tpu.memory_space<vmem>>, %arg4: memref<8x36xf32, #tpu.memory_space<vmem>>, %arg5: memref<16x36xf32, #tpu.memory_space<vmem>>, %arg6: memref<8x36xf32, #tpu.memory_space<vmem>>, %arg7: memref<1x8xf32, #tpu.memory_space<vmem>>) attributes {dimension_semantics = [#tpu.dimension_semantics<parallel>], iteration_bounds = array<i64: 1>, scalar_prefetch = 0 : i64, scratch_operands = 0 : i64, tpu.core_type = #tpu.core_type<tc>, window_params = [{transform_indices = @transform_0, window_bounds = array<i64: 1, 8, 16>}, {transform_indices = @transform_1, window_bounds = array<i64: 1, 8, 16>}, {pipeline_mode = #tpu.pipeline_mode<synchronous>, transform_indices = @transform_2, window_bounds = array<i64: 16, 36>}, {pipeline_mode = #tpu.pipeline_mode<synchronous>, transform_indices = @transform_3, window_bounds = array<i64: 8, 36>}, {pipeline_mode = #tpu.pipeline_mode<synchronous>, transform_indices = @transform_4, window_bounds = array<i64: 16, 36>}, {pipeline_mode = #tpu.pipeline_mode<synchronous>, transform_indices = @transform_5, window_bounds = array<i64: 8, 36>}, {transform_indices = @transform_6, window_bounds = array<i64: 1, 8>}]} {
    %c0 = arith.constant 0 : index
    %c0_0 = arith.constant 0 : index
    %c0_1 = arith.constant 0 : index
    %0 = vector.load %arg1[%c0, %c0_0, %c0_1] : memref<1x8x16xf32, #tpu.memory_space<vmem>>, vector<1x8x16xf32>
    %c0_2 = arith.constant 0 : index
    %c0_3 = arith.constant 0 : index
    %c0_4 = arith.constant 0 : index
    %1 = vector.load %arg2[%c0_2, %c0_3, %c0_4] : memref<1x8x16xf32, #tpu.memory_space<vmem>>, vector<1x8x16xf32>
    %c0_5 = arith.constant 0 : index
    %c0_6 = arith.constant 0 : index
    %2 = vector.load %arg6[%c0_5, %c0_6] : memref<8x36xf32, #tpu.memory_space<vmem>>, vector<8x36xf32>
    %3 = vector.extract_strided_slice %2 {offsets = [0, 0], sizes = [1, 36], strides = [1, 1]} : vector<8x36xf32> to vector<1x36xf32>
    %4 = vector.extract_strided_slice %2 {offsets = [1, 0], sizes = [1, 36], strides = [1, 1]} : vector<8x36xf32> to vector<1x36xf32>
    %5 = vector.extract_strided_slice %2 {offsets = [2, 0], sizes = [1, 36], strides = [1, 1]} : vector<8x36xf32> to vector<1x36xf32>
    %6 = vector.extract_strided_slice %2 {offsets = [3, 0], sizes = [1, 36], strides = [1, 1]} : vector<8x36xf32> to vector<1x36xf32>
    %7 = vector.extract_strided_slice %2 {offsets = [4, 0], sizes = [1, 36], strides = [1, 1]} : vector<8x36xf32> to vector<1x36xf32>
    %8 = vector.extract_strided_slice %2 {offsets = [5, 0], sizes = [1, 36], strides = [1, 1]} : vector<8x36xf32> to vector<1x36xf32>
    %9 = vector.extract_strided_slice %2 {offsets = [6, 0], sizes = [1, 1], strides = [1, 1]} : vector<8x36xf32> to vector<1x1xf32>
    "tpu.trace_start"() <{level = 10 : i32, message = "gbe,gce->gbc"}> : () -> ()
    %cst = arith.constant dense<0.000000e+00> : vector<1x8x8xf32>
    %10 = tpu.matmul %0, %1, %cst {dimension_numbers = #tpu.dot_dimension_numbers<[2], [2], [1], [1], [0, 0, 0, 1, 1, 1], [0], [0]>} : vector<1x8x16xf32>, vector<1x8x16xf32>, vector<1x8x8xf32> -> vector<1x8x8xf32>
    "tpu.trace_stop"() : () -> ()
    %11 = vector.shape_cast %0 : vector<1x8x16xf32> to vector<8x16xf32>
    %c0_7 = arith.constant 0 : index
    %c0_8 = arith.constant 0 : index
    %12 = vector.load %arg3[%c0_7, %c0_8] : memref<16x36xf32, #tpu.memory_space<vmem>>, vector<16x36xf32>
    %cst_9 = arith.constant dense<0.000000e+00> : vector<8x36xf32>
    %13 = tpu.matmul %11, %12, %cst_9 {dimension_numbers = #tpu.dot_dimension_numbers<[1], [0], [0], [1], [0, 0, 1, 1], [], []>} : vector<8x16xf32>, vector<16x36xf32>, vector<8x36xf32> -> vector<8x36xf32>
    %14 = vector.shape_cast %10 : vector<1x8x8xf32> to vector<8x8xf32>
    %c0_10 = arith.constant 0 : index
    %c0_11 = arith.constant 0 : index
    %15 = vector.load %arg4[%c0_10, %c0_11] : memref<8x36xf32, #tpu.memory_space<vmem>>, vector<8x36xf32>
    %cst_12 = arith.constant dense<0.000000e+00> : vector<8x36xf32>
    %16 = tpu.matmul %14, %15, %cst_12 {dimension_numbers = #tpu.dot_dimension_numbers<[1], [0], [0], [1], [0, 0, 1, 1], [], []>} : vector<8x8xf32>, vector<8x36xf32>, vector<8x36xf32> -> vector<8x36xf32>
    %17 = arith.addf %13, %16 : vector<8x36xf32>
    %18 = vector.shape_cast %1 : vector<1x8x16xf32> to vector<8x16xf32>
    %c0_13 = arith.constant 0 : index
    %c0_14 = arith.constant 0 : index
    %19 = vector.load %arg5[%c0_13, %c0_14] : memref<16x36xf32, #tpu.memory_space<vmem>>, vector<16x36xf32>
    %cst_15 = arith.constant dense<0.000000e+00> : vector<8x36xf32>
    %20 = tpu.matmul %18, %19, %cst_15 {dimension_numbers = #tpu.dot_dimension_numbers<[1], [0], [0], [1], [0, 0, 1, 1], [], []>} : vector<8x16xf32>, vector<16x36xf32>, vector<8x36xf32> -> vector<8x36xf32>
    %21 = arith.addf %17, %20 : vector<8x36xf32>
    %22 = vector.shape_cast %21 : vector<8x36xf32> to vector<1x8x36xf32>
    %23 = vector.shape_cast %3 : vector<1x36xf32> to vector<1x1x36xf32>
    %24 = vector.broadcast %23 : vector<1x1x36xf32> to vector<1x8x36xf32>
    %25 = arith.addf %22, %24 : vector<1x8x36xf32>
    %cst_16 = arith.constant dense<0.000000e+00> : vector<1x36xf32>
    %26 = vector.multi_reduction <add>, %25, %cst_16 [1] : vector<1x8x36xf32> to vector<1x36xf32>
    %27 = vector.shape_cast %26 : vector<1x36xf32> to vector<1x1x36xf32>
    %cst_17 = arith.constant 8.000000e+00 : f32
    %28 = vector.broadcast %cst_17 : f32 to vector<1x1x36xf32>
    %29 = arith.divf %27, %28 : vector<1x1x36xf32>
    %30 = vector.broadcast %29 : vector<1x1x36xf32> to vector<1x8x36xf32>
    %31 = arith.subf %25, %30 : vector<1x8x36xf32>
    %32 = arith.mulf %31, %31 : vector<1x8x36xf32>
    %cst_18 = arith.constant dense<0.000000e+00> : vector<1x36xf32>
    %33 = vector.multi_reduction <add>, %32, %cst_18 [1] : vector<1x8x36xf32> to vector<1x36xf32>
    %34 = vector.shape_cast %33 : vector<1x36xf32> to vector<1x1x36xf32>
    %cst_19 = arith.constant 8.000000e+00 : f32
    %35 = vector.broadcast %cst_19 : f32 to vector<1x1x36xf32>
    %36 = arith.divf %34, %35 : vector<1x1x36xf32>
    %37 = vector.broadcast %29 : vector<1x1x36xf32> to vector<1x8x36xf32>
    %38 = arith.subf %25, %37 : vector<1x8x36xf32>
    %cst_20 = arith.constant 9.99999993E-9 : f32
    %39 = vector.broadcast %cst_20 : f32 to vector<1x1x36xf32>
    %40 = arith.addf %36, %39 : vector<1x1x36xf32>
    %41 = math.rsqrt %40 : vector<1x1x36xf32>
    %42 = vector.broadcast %41 : vector<1x1x36xf32> to vector<1x8x36xf32>
    %43 = arith.mulf %38, %42 : vector<1x8x36xf32>
    %44 = vector.shape_cast %6 : vector<1x36xf32> to vector<1x1x36xf32>
    %45 = vector.broadcast %44 : vector<1x1x36xf32> to vector<1x8x36xf32>
    %46 = arith.mulf %43, %45 : vector<1x8x36xf32>
    %47 = vector.shape_cast %7 : vector<1x36xf32> to vector<1x1x36xf32>
    %48 = vector.broadcast %47 : vector<1x1x36xf32> to vector<1x8x36xf32>
    %49 = arith.addf %46, %48 : vector<1x8x36xf32>
    %50 = vector.shape_cast %5 : vector<1x36xf32> to vector<1x1x36xf32>
    %51 = vector.broadcast %50 : vector<1x1x36xf32> to vector<1x8x36xf32>
    %52 = arith.mulf %51, %49 : vector<1x8x36xf32>
    %53 = arith.negf %52 : vector<1x8x36xf32>
    %54 = math.exp %53 : vector<1x8x36xf32>
    %cst_21 = arith.constant 1.000000e+00 : f32
    %55 = vector.broadcast %cst_21 : f32 to vector<1x8x36xf32>
    %56 = arith.addf %55, %54 : vector<1x8x36xf32>
    %57 = arith.divf %55, %56 : vector<1x8x36xf32>
    %cst_22 = arith.constant 1.000000e+00 : f32
    %58 = vector.broadcast %cst_22 : f32 to vector<1x36xf32>
    %59 = arith.subf %58, %4 : vector<1x36xf32>
    %60 = vector.shape_cast %59 : vector<1x36xf32> to vector<1x1x36xf32>
    %61 = vector.broadcast %60 : vector<1x1x36xf32> to vector<1x8x36xf32>
    %62 = arith.mulf %57, %61 : vector<1x8x36xf32>
    %63 = vector.shape_cast %4 : vector<1x36xf32> to vector<1x1x36xf32>
    %64 = vector.broadcast %63 : vector<1x1x36xf32> to vector<1x8x36xf32>
    %65 = arith.addf %64, %62 : vector<1x8x36xf32>
    %66 = arith.mulf %25, %65 : vector<1x8x36xf32>
    %67 = vector.shape_cast %8 : vector<1x36xf32> to vector<1x1x36xf32>
    %68 = vector.broadcast %67 : vector<1x1x36xf32> to vector<1x8x36xf32>
    %69 = arith.mulf %66, %68 : vector<1x8x36xf32>
    %cst_23 = arith.constant dense<0.000000e+00> : vector<1x8xf32>
    %70 = vector.multi_reduction <add>, %69, %cst_23 [2] : vector<1x8x36xf32> to vector<1x8xf32>
    %71 = vector.broadcast %9 : vector<1x1xf32> to vector<1x8xf32>
    %72 = arith.addf %70, %71 : vector<1x8xf32>
    %c0_24 = arith.constant 0 : index
    %c0_25 = arith.constant 0 : index
    %73 = vector.load %arg7[%c0_24, %c0_25] : memref<1x8xf32, #tpu.memory_space<vmem>>, vector<1x8xf32>
    tpu.vector_store %arg7[%c0_24, %c0_25], %72 {strides = array<i32>} : memref<1x8xf32, #tpu.memory_space<vmem>>, vector<1x8xf32>,
    return
  }
  func.func @transform_0(%arg0: i32) -> (i32, i32, i32) {
    %c0_i32 = arith.constant 0 : i32
    %c0_i32_0 = arith.constant 0 : i32
    %c0_i32_1 = arith.constant 0 : i32
    return %arg0, %c0_i32, %c0_i32_0 : i32, i32, i32
  }
  func.func @transform_1(%arg0: i32) -> (i32, i32, i32) {
    %c0_i32 = arith.constant 0 : i32
    %c0_i32_0 = arith.constant 0 : i32
    %c0_i32_1 = arith.constant 0 : i32
    return %arg0, %c0_i32, %c0_i32_0 : i32, i32, i32
  }
  func.func @transform_2(%arg0: i32) -> (i32, i32) {
    %c0_i32 = arith.constant 0 : i32
    %c0_i32_0 = arith.constant 0 : i32
    %c0_i32_1 = arith.constant 0 : i32
    return %c0_i32, %c0_i32_0 : i32, i32
  }
  func.func @transform_3(%arg0: i32) -> (i32, i32) {
    %c0_i32 = arith.constant 0 : i32
    %c0_i32_0 = arith.constant 0 : i32
    %c0_i32_1 = arith.constant 0 : i32
    return %c0_i32, %c0_i32_0 : i32, i32
  }
  func.func @transform_4(%arg0: i32) -> (i32, i32) {
    %c0_i32 = arith.constant 0 : i32
    %c0_i32_0 = arith.constant 0 : i32
    %c0_i32_1 = arith.constant 0 : i32
    return %c0_i32, %c0_i32_0 : i32, i32
  }
  func.func @transform_5(%arg0: i32) -> (i32, i32) {
    %c0_i32 = arith.constant 0 : i32
    %c0_i32_0 = arith.constant 0 : i32
    %c0_i32_1 = arith.constant 0 : i32
    return %c0_i32, %c0_i32_0 : i32, i32
  }
  func.func @transform_6(%arg0: i32) -> (i32, i32) {
    %c0_i32 = arith.constant 0 : i32
    %c0_i32_0 = arith.constant 0 : i32
    return %arg0, %c0_i32 : i32, i32
  }
}

</mosaic_0001>

<llo_original>
// kernel: tpu_custom_call.1
$region0: #{tpu_custom_call.1}
  #allocation0 [shape = 'u32[]', space=smem, size = 0x4, offset = 0x4, fixed_abs, tag = 'smem constant byte address 0x4 - core index']
  #allocation1 [shape = 'u32[144,128]{1,0:T(1,128)}', space=vmem, size = 0x12000, scoped, tag = 'internal scratch']
  %s0 = inlined_call_operand.hbm [shape: f32[1,8,16], index: 0, kind: input, shape index: {}]
  %s1 = inlined_call_operand.hbm [shape: f32[1,8,16], index: 1, kind: input, shape index: {}]
  %s2 = inlined_call_operand.hbm [shape: f32[16,36], index: 2, kind: input, shape index: {}]
  %s3 = inlined_call_operand.vmem [shape: f32[8,36], index: 3, kind: input, shape index: {}]
  %s4 = inlined_call_operand.hbm [shape: f32[16,36], index: 4, kind: input, shape index: {}]
  %s5 = inlined_call_operand.vmem [shape: f32[8,36], index: 5, kind: input, shape index: {}]
  %s6 = inlined_call_operand.hbm [shape: f32[1,8], index: 6, kind: output, shape index: {}]
  %s7 = sld [smem:[#allocation0]]
  $region50: #{tpu_custom_call.1} parent=0
    _
  %s9 = ssub.s32 1, %s7
  %s10 = scalar_select 0, %s9, %s7
  $region1: #{tpu_custom_call.1} parent=0
    #allocation2 [shape = 'u8[4096]{0}', space=vmem, size = 0x1000, scoped, tag = 'input window, operand 0, single buffered']
    #allocation3 [shape = 's32[1]{0}', space=sflag, size = 0x4, scoped, tag = 'scoped memory for tpu_custom_call.1']
    #allocation4 [shape = 's32[1]{0}', space=sflag, size = 0x4, scoped, tag = 'scoped memory for tpu_custom_call.1']
    #allocation5 [shape = 'u8[4096]{0}', space=vmem, size = 0x1000, scoped, tag = 'input window, operand 1, single buffered']
    #allocation6 [shape = 's32[1]{0}', space=sflag, size = 0x4, scoped, tag = 'scoped memory for tpu_custom_call.1']
    #allocation7 [shape = 'u8[8192]{0}', space=vmem, size = 0x2000, scoped, tag = 'input window, operand 2, single buffered']
    #allocation8 [shape = 'u8[8192]{0}', space=vmem, size = 0x2000, scoped, tag = 'input window, operand 4, single buffered']
    #allocation9 [shape = 's32[1]{0}', space=sflag, size = 0x4, scoped, tag = 'scoped memory for tpu_custom_call.1']
    #allocation10 [shape = 'u8[512]{0}', space=vmem, size = 0x400, scoped, tag = 'output window, operand 0, single buffered']
    %11 = vsyncpa [#allocation3], 0
    %12 = vsyncpa [#allocation6], 0
    %13 = vsyncpa [#allocation9], 0
    %14 = vsyncpa [#allocation4], 0
    // Predicated region
    $region2: #{tpu_custom_call.1} parent=1 // pred_check
      _
    $region3: #{tpu_custom_call.1} parent=1 // pred_check_branch
      %16 = sbr.rel (0) target = $region5
    $region4: #{tpu_custom_call.1} parent=1 // pred_region
      %s18 = ssub.s32 128, 128
      %19 = vsyncadd [#allocation3], %s18
      %s21 = sshll.u32 [#allocation2], 4
      %s22 = int_to_ptr.vmem [resolvable:$true] %s21
      %24 = dma.hbm_to_vmem [thread:$0]  %s0, 128, %s22, [#allocation3]
    $region5: #{tpu_custom_call.1} parent=1 // pred_fallthru
      _
    // Predicated region
    $region6: #{tpu_custom_call.1} parent=1 // pred_check
      _
    $region7: #{tpu_custom_call.1} parent=1 // pred_check_branch
      %26 = sbr.rel (0) target = $region9
    $region8: #{tpu_custom_call.1} parent=1 // pred_region
      %s28 = ssub.s32 128, 128
      %29 = vsyncadd [#allocation6], %s28
      %s31 = sshll.u32 [#allocation5], 4
      %s32 = int_to_ptr.vmem [resolvable:$true] %s31
      %34 = dma.hbm_to_vmem [thread:$0]  %s1, 128, %s32, [#allocation6]
    $region9: #{tpu_custom_call.1} parent=1 // pred_fallthru
      _
    // Predicated region
    $region10: #{tpu_custom_call.1} parent=1 // pred_check
      _
    $region11: #{tpu_custom_call.1} parent=1 // pred_check_branch
      %36 = sbr.rel (0) target = $region13
    $region12: #{tpu_custom_call.1} parent=1 // pred_region
      %s38 = ssub.s32 256, 256
      %39 = vsyncadd [#allocation6], %s38
      %s40 = sshll.u32 [#allocation7], 4
      %s41 = int_to_ptr.vmem [resolvable:$true] %s40
      %46 = dma.hbm_to_vmem [thread:$0]  %s2, 256, %s41, [#allocation6], 128, 128, 8
    $region13: #{tpu_custom_call.1} parent=1 // pred_fallthru
      _
    // Predicated region
    $region14: #{tpu_custom_call.1} parent=1 // pred_check
      _
    $region15: #{tpu_custom_call.1} parent=1 // pred_check_branch
      %48 = sbr.rel (0) target = $region17
    $region16: #{tpu_custom_call.1} parent=1 // pred_region
      _
    $region17: #{tpu_custom_call.1} parent=1 // pred_fallthru
      _
    // Predicated region
    $region18: #{tpu_custom_call.1} parent=1 // pred_check
      _
    $region19: #{tpu_custom_call.1} parent=1 // pred_check_branch
      %50 = sbr.rel (0) target = $region21
    $region20: #{tpu_custom_call.1} parent=1 // pred_region
      %s52 = ssub.s32 256, 256
      %53 = vsyncadd [#allocation9], %s52
      %s54 = sshll.u32 [#allocation8], 4
      %s55 = int_to_ptr.vmem [resolvable:$true] %s54
      %60 = dma.hbm_to_vmem [thread:$0]  %s4, 256, %s55, [#allocation9], 128, 128, 8
    $region21: #{tpu_custom_call.1} parent=1 // pred_fallthru
      _
    // Predicated region
    $region22: #{tpu_custom_call.1} parent=1 // pred_check
      _
    $region23: #{tpu_custom_call.1} parent=1 // pred_check_branch
      %62 = sbr.rel (0) target = $region25
    $region24: #{tpu_custom_call.1} parent=1 // pred_region
      _
    $region25: #{tpu_custom_call.1} parent=1 // pred_fallthru
      _
    // Predicated region
    $region26: #{tpu_custom_call.1} parent=1 // pred_check
      _
    $region27: #{tpu_custom_call.1} parent=1 // pred_check_branch
      %64 = sbr.rel (0) target = $region29
    $region28: #{tpu_custom_call.1} parent=1 // pred_region
      %65 = dma.done [#allocation3], 128
    $region29: #{tpu_custom_call.1} parent=1 // pred_fallthru
      _
    // Predicated region
    $region30: #{tpu_custom_call.1} parent=1 // pred_check
      _
    $region31: #{tpu_custom_call.1} parent=1 // pred_check_branch
      %67 = sbr.rel (0) target = $region33
    $region32: #{tpu_custom_call.1} parent=1 // pred_region
      %68 = dma.done [#allocation6], 128
    $region33: #{tpu_custom_call.1} parent=1 // pred_fallthru
      _
    // Predicated region
    $region34: #{tpu_custom_call.1} parent=1 // pred_check
      _
    $region35: #{tpu_custom_call.1} parent=1 // pred_check_branch
      %70 = sbr.rel (0) target = $region37
    $region36: #{tpu_custom_call.1} parent=1 // pred_region
      %71 = dma.done [#allocation6], 256
    $region37: #{tpu_custom_call.1} parent=1 // pred_fallthru
      _
    // Predicated region
    $region38: #{tpu_custom_call.1} parent=1 // pred_check
      _
    $region39: #{tpu_custom_call.1} parent=1 // pred_check_branch
      %73 = sbr.rel (0) target = $region41
    $region40: #{tpu_custom_call.1} parent=1 // pred_region
      %74 = dma.done [#allocation9], 256
    $region41: #{tpu_custom_call.1} parent=1 // pred_fallthru
      _
    %v75 = vld [vmem:[#allocation2] sm:$0xff]
    %v76 = vld [vmem:[#allocation5] sm:$0xff]
    %v77 = vld [vmem:[%s5] sm:$0xff]
    %vm78 = vcmask 130048
    %v80 = vsel %vm78, %v75, 0
    %v83 = vsel %vm78, %v76, 0
    %85 = vmatprep.subr.mxu0 0.0
    %86 = vmatpush1.xpose.msra.mxu0 %v83
    %87 = vmatprep.subr.mxu0 0.0
    %88 = vmatpush1.xpose.msra.mxu0 0.0
    %89 = vmatprep.subr.mxu0 0.0
    %90 = vmatpush1.xpose.msra.mxu0 0.0
    %91 = vmatprep.subr.mxu0 0.0
    %92 = vmatpush1.xpose.msra.mxu0 0.0
    %93 = vmatprep.subr.mxu0 0.0
    %94 = vmatpush1.xpose.msra.mxu0 0.0
    %95 = vmatprep.subr.mxu0 0.0
    %96 = vmatpush1.xpose.msra.mxu0 0.0
    %97 = vmatprep.subr.mxu0 0.0
    %98 = vmatpush1.xpose.msra.mxu0 0.0
    %99 = vmatprep.subr.mxu0 0.0
    %100 = vmatpush1.xpose.msra.mxu0 0.0
    %101 = vmatprep.subr.mxu0 0.0
    %102 = vmatpush1.xpose.msra.mxu0 0.0
    %103 = vmatprep.subr.mxu0 0.0
    %104 = vmatpush1.xpose.msra.mxu0 0.0
    %105 = vmatprep.subr.mxu0 0.0
    %106 = vmatpush1.xpose.msra.mxu0 0.0
    %107 = vmatprep.subr.mxu0 0.0
    %108 = vmatpush1.xpose.msra.mxu0 0.0
    %109 = vmatprep.subr.mxu0 0.0
    %110 = vmatpush1.xpose.msra.mxu0 0.0
    %111 = vmatprep.subr.mxu0 0.0
    %112 = vmatpush1.xpose.msra.mxu0 0.0
    %113 = vmatprep.subr.mxu0 0.0
    %114 = vmatpush1.xpose.msra.mxu0 0.0
    %115 = vmatprep.subr.mxu0 0.0
    %116 = vmatpush1.xpose.msra.mxu0 0.0
    %117 = vmatprep.subr.mxu0 0.0
    %118 = vmatpush1.xpose.msra.mxu0 0.0
    %119 = vmatprep.subr.mxu0 0.0
    %120 = vmatpush1.xpose.msra.mxu0 0.0
    %121 = vmatprep.subr.mxu0 0.0
    %122 = vmatpush1.xpose.msra.mxu0 0.0
    %123 = vmatprep.subr.mxu0 0.0
    %124 = vmatpush1.xpose.msra.mxu0 0.0
    %125 = vmatprep.subr.mxu0 0.0
    %126 = vmatpush1.xpose.msra.mxu0 0.0
    %127 = vmatprep.subr.mxu0 0.0
    %128 = vmatpush1.xpose.msra.mxu0 0.0
    %129 = vmatprep.subr.mxu0 0.0
    %130 = vmatpush1.xpose.msra.mxu0 0.0
    %131 = vmatprep.subr.mxu0 0.0
    %132 = vmatpush1.xpose.msra.mxu0 0.0
    %133 = vmatprep.subr.mxu0 0.0
    %134 = vmatpush1.xpose.msra.mxu0 0.0
    %135 = vmatprep.subr.mxu0 0.0
    %136 = vmatpush1.xpose.msra.mxu0 0.0
    %137 = vmatprep.subr.mxu0 0.0
    %138 = vmatpush1.xpose.msra.mxu0 0.0
    %139 = vmatprep.subr.mxu0 0.0
    %140 = vmatpush1.xpose.msra.mxu0 0.0
    %141 = vmatprep.subr.mxu0 0.0
    %142 = vmatpush1.xpose.msra.mxu0 0.0
    %143 = vmatprep.subr.mxu0 0.0
    %144 = vmatpush1.xpose.msra.mxu0 0.0
    %145 = vmatprep.subr.mxu0 0.0
    %146 = vmatpush1.xpose.msra.mxu0 0.0
    %147 = vmatprep.subr.mxu0 0.0
    %148 = vmatpush1.xpose.msra.mxu0 0.0
    %149 = vmatprep.mubr.f32.mxu0 0.0
    %150 = vmatmul.mubr.f32.gmra.mrb[0].mxu0 %v80
    %v151 = vpop.f32.mrb[0].mxu0
    %v152 = vadd.f32 0.0, %v151
    %v153 = vpop.f32.mrb[0].mxu0
    %154 = vdwg.mxu0
    %v155 = vld [vmem:[#allocation7] sm:$0xff]
    %v156 = vld [vmem:[#allocation7 + $0x8] sm:$0xff]
    %v157 = vld [vmem:[%s3] sm:$0xff]
    %vm158 = vcmask 64512
    %v160 = vsel %vm158, %v152, 0
    %162 = vmatprep.subr.mxu0 0.0
    %163 = vmatpush1.msra.mxu0 %v157
    %164 = vmatprep.subr.mxu0 0.0
    %165 = vmatpush1.msra.mxu0 0.0
    %166 = vmatprep.subr.mxu0 0.0
    %167 = vmatpush1.msra.mxu0 0.0
    %168 = vmatprep.subr.mxu0 0.0
    %169 = vmatpush1.msra.mxu0 0.0
    %170 = vmatprep.subr.mxu0 0.0
    %171 = vmatpush1.msra.mxu0 0.0
    %172 = vmatprep.subr.mxu0 0.0
    %173 = vmatpush1.msra.mxu0 0.0
    %174 = vmatprep.subr.mxu0 0.0
    %175 = vmatpush1.msra.mxu0 0.0
    %176 = vmatprep.subr.mxu0 0.0
    %177 = vmatpush1.msra.mxu0 0.0
    %178 = vmatprep.subr.mxu0 0.0
    %179 = vmatpush1.msra.mxu0 0.0
    %180 = vmatprep.subr.mxu0 0.0
    %181 = vmatpush1.msra.mxu0 0.0
    %182 = vmatprep.subr.mxu0 0.0
    %183 = vmatpush1.msra.mxu0 0.0
    %184 = vmatprep.subr.mxu0 0.0
    %185 = vmatpush1.msra.mxu0 0.0
    %186 = vmatprep.subr.mxu0 0.0
    %187 = vmatpush1.msra.mxu0 0.0
    %188 = vmatprep.subr.mxu0 0.0
    %189 = vmatpush1.msra.mxu0 0.0
    %190 = vmatprep.subr.mxu0 0.0
    %191 = vmatpush1.msra.mxu0 0.0
    %192 = vmatprep.subr.mxu0 0.0
    %193 = vmatpush1.msra.mxu0 0.0
    %194 = vmatprep.subr.mxu0 0.0
    %195 = vmatpush1.msra.mxu0 0.0
    %196 = vmatprep.subr.mxu0 0.0
    %197 = vmatpush1.msra.mxu0 0.0
    %198 = vmatprep.subr.mxu0 0.0
    %199 = vmatpush1.msra.mxu0 0.0
    %200 = vmatprep.subr.mxu0 0.0
    %201 = vmatpush1.msra.mxu0 0.0
    %202 = vmatprep.subr.mxu0 0.0
    %203 = vmatpush1.msra.mxu0 0.0
    %204 = vmatprep.subr.mxu0 0.0
    %205 = vmatpush1.msra.mxu0 0.0
    %206 = vmatprep.subr.mxu0 0.0
    %207 = vmatpush1.msra.mxu0 0.0
    %208 = vmatprep.subr.mxu0 0.0
    %209 = vmatpush1.msra.mxu0 0.0
    %210 = vmatprep.subr.mxu0 0.0
    %211 = vmatpush1.msra.mxu0 0.0
    %212 = vmatprep.subr.mxu0 0.0
    %213 = vmatpush1.msra.mxu0 0.0
    %214 = vmatprep.subr.mxu0 0.0
    %215 = vmatpush1.msra.mxu0 0.0
    %216 = vmatprep.subr.mxu0 0.0
    %217 = vmatpush1.msra.mxu0 0.0
    %218 = vmatprep.subr.mxu0 0.0
    %219 = vmatpush1.msra.mxu0 0.0
    %220 = vmatprep.subr.mxu0 0.0
    %221 = vmatpush1.msra.mxu0 0.0
    %222 = vmatprep.subr.mxu0 0.0
    %223 = vmatpush1.msra.mxu0 0.0
    %224 = vmatprep.subr.mxu0 0.0
    %225 = vmatpush1.msra.mxu0 0.0
    %226 = vmatprep.mubr.f32.mxu0 0.0
    %227 = vmatmul.mubr.f32.gmra.mrb[0].mxu0 %v160
    %v228 = vpop.f32.mrb[0].mxu0
    %v229 = vadd.f32 0.0, %v228
    %v230 = vpop.f32.mrb[0].mxu0
    %231 = vdwg.mxu0
    %232 = vmatprep.subr.mxu0 0.0
    %233 = vmatpush1.msra.mxu0 %v155
    %234 = vmatprep.subr.mxu0 0.0
    %235 = vmatpush1.msra.mxu0 %v156
    %236 = vmatprep.subr.mxu0 0.0
    %237 = vmatpush1.msra.mxu0 0.0
    %238 = vmatprep.subr.mxu0 0.0
    %239 = vmatpush1.msra.mxu0 0.0
    %240 = vmatprep.subr.mxu0 0.0
    %241 = vmatpush1.msra.mxu0 0.0
    %242 = vmatprep.subr.mxu0 0.0
    %243 = vmatpush1.msra.mxu0 0.0
    %244 = vmatprep.subr.mxu0 0.0
    %245 = vmatpush1.msra.mxu0 0.0
    %246 = vmatprep.subr.mxu0 0.0
    %247 = vmatpush1.msra.mxu0 0.0
    %248 = vmatprep.subr.mxu0 0.0
    %249 = vmatpush1.msra.mxu0 0.0
    %250 = vmatprep.subr.mxu0 0.0
    %251 = vmatpush1.msra.mxu0 0.0
    %252 = vmatprep.subr.mxu0 0.0
    %253 = vmatpush1.msra.mxu0 0.0
    %254 = vmatprep.subr.mxu0 0.0
    %255 = vmatpush1.msra.mxu0 0.0
    %256 = vmatprep.subr.mxu0 0.0
    %257 = vmatpush1.msra.mxu0 0.0
    %258 = vmatprep.subr.mxu0 0.0
    %259 = vmatpush1.msra.mxu0 0.0
    %260 = vmatprep.subr.mxu0 0.0
    %261 = vmatpush1.msra.mxu0 0.0
    %262 = vmatprep.subr.mxu0 0.0
    %263 = vmatpush1.msra.mxu0 0.0
    %264 = vmatprep.subr.mxu0 0.0
    %265 = vmatpush1.msra.mxu0 0.0
    %266 = vmatprep.subr.mxu0 0.0
    %267 = vmatpush1.msra.mxu0 0.0
    %268 = vmatprep.subr.mxu0 0.0
    %269 = vmatpush1.msra.mxu0 0.0
    %270 = vmatprep.subr.mxu0 0.0
    %271 = vmatpush1.msra.mxu0 0.0
    %272 = vmatprep.subr.mxu0 0.0
    %273 = vmatpush1.msra.mxu0 0.0
    %274 = vmatprep.subr.mxu0 0.0
    %275 = vmatpush1.msra.mxu0 0.0
    %276 = vmatprep.subr.mxu0 0.0
    %277 = vmatpush1.msra.mxu0 0.0
    %278 = vmatprep.subr.mxu0 0.0
    %279 = vmatpush1.msra.mxu0 0.0
    %280 = vmatprep.subr.mxu0 0.0
    %281 = vmatpush1.msra.mxu0 0.0
    %282 = vmatprep.subr.mxu0 0.0
    %283 = vmatpush1.msra.mxu0 0.0
    %284 = vmatprep.subr.mxu0 0.0
    %285 = vmatpush1.msra.mxu0 0.0
    %286 = vmatprep.subr.mxu0 0.0
    %287 = vmatpush1.msra.mxu0 0.0
    %288 = vmatprep.subr.mxu0 0.0
    %289 = vmatpush1.msra.mxu0 0.0
    %290 = vmatprep.subr.mxu0 0.0
    %291 = vmatpush1.msra.mxu0 0.0
    %292 = vmatprep.subr.mxu0 0.0
    %293 = vmatpush1.msra.mxu0 0.0
    %294 = vmatprep.subr.mxu0 0.0
    %295 = vmatpush1.msra.mxu0 0.0
    %296 = vmatprep.mubr.f32.mxu0 0.0
    %297 = vmatmul.mubr.f32.gmra.mrb[0].mxu0 %v80
    %v298 = vpop.f32.mrb[0].mxu0
    %v299 = vadd.f32 %v229, %v298
    %v300 = vpop.f32.mrb[0].mxu0
    %301 = vdwg.mxu0
    %v302 = vld [vmem:[#allocation8] sm:$0xff]
    %v303 = vld [vmem:[#allocation8 + $0x8] sm:$0xff]
    %304 = vmatprep.subr.mxu0 0.0
    %305 = vmatpush1.msra.mxu0 %v302
    %306 = vmatprep.subr.mxu0 0.0
    %307 = vmatpush1.msra.mxu0 %v303
    %308 = vmatprep.subr.mxu0 0.0
    %309 = vmatpush1.msra.mxu0 0.0
    %310 = vmatprep.subr.mxu0 0.0
    %311 = vmatpush1.msra.mxu0 0.0
    %312 = vmatprep.subr.mxu0 0.0
    %313 = vmatpush1.msra.mxu0 0.0
    %314 = vmatprep.subr.mxu0 0.0
    %315 = vmatpush1.msra.mxu0 0.0
    %316 = vmatprep.subr.mxu0 0.0
    %317 = vmatpush1.msra.mxu0 0.0
    %318 = vmatprep.subr.mxu0 0.0
    %319 = vmatpush1.msra.mxu0 0.0
    %320 = vmatprep.subr.mxu0 0.0
    %321 = vmatpush1.msra.mxu0 0.0
    %322 = vmatprep.subr.mxu0 0.0
    %323 = vmatpush1.msra.mxu0 0.0
    %324 = vmatprep.subr.mxu0 0.0
    %325 = vmatpush1.msra.mxu0 0.0
    %326 = vmatprep.subr.mxu0 0.0
    %327 = vmatpush1.msra.mxu0 0.0
    %328 = vmatprep.subr.mxu0 0.0
    %329 = vmatpush1.msra.mxu0 0.0
    %330 = vmatprep.subr.mxu0 0.0
    %331 = vmatpush1.msra.mxu0 0.0
    %332 = vmatprep.subr.mxu0 0.0
    %333 = vmatpush1.msra.mxu0 0.0
    %334 = vmatprep.subr.mxu0 0.0
    %335 = vmatpush1.msra.mxu0 0.0
    %336 = vmatprep.subr.mxu0 0.0
    %337 = vmatpush1.msra.mxu0 0.0
    %338 = vmatprep.subr.mxu0 0.0
    %339 = vmatpush1.msra.mxu0 0.0
    %340 = vmatprep.subr.mxu0 0.0
    %341 = vmatpush1.msra.mxu0 0.0
    %342 = vmatprep.subr.mxu0 0.0
    %343 = vmatpush1.msra.mxu0 0.0
    %344 = vmatprep.subr.mxu0 0.0
    %345 = vmatpush1.msra.mxu0 0.0
    %346 = vmatprep.subr.mxu0 0.0
    %347 = vmatpush1.msra.mxu0 0.0
    %348 = vmatprep.subr.mxu0 0.0
    %349 = vmatpush1.msra.mxu0 0.0
    %350 = vmatprep.subr.mxu0 0.0
    %351 = vmatpush1.msra.mxu0 0.0
    %352 = vmatprep.subr.mxu0 0.0
    %353 = vmatpush1.msra.mxu0 0.0
    %354 = vmatprep.subr.mxu0 0.0
    %355 = vmatpush1.msra.mxu0 0.0
    %356 = vmatprep.subr.mxu0 0.0
    %357 = vmatpush1.msra.mxu0 0.0
    %358 = vmatprep.subr.mxu0 0.0
    %359 = vmatpush1.msra.mxu0 0.0
    %360 = vmatprep.subr.mxu0 0.0
    %361 = vmatpush1.msra.mxu0 0.0
    %362 = vmatprep.subr.mxu0 0.0
    %363 = vmatpush1.msra.mxu0 0.0
    %364 = vmatprep.subr.mxu0 0.0
    %365 = vmatpush1.msra.mxu0 0.0
    %366 = vmatprep.subr.mxu0 0.0
    %367 = vmatpush1.msra.mxu0 0.0
    %368 = vmatprep.mubr.f32.mxu0 0.0
    %369 = vmatmul.mubr.f32.gmra.mrb[0].mxu0 %v83
    %v370 = vpop.f32.mrb[0].mxu0
    %v371 = vadd.f32 0.0, %v370
    %v372 = vpop.f32.mrb[0].mxu0
    %373 = vdwg.mxu0
    %v374 = vadd.f32 %v299, %v371
    %v375 = vlaneseq
    %v376 = vshrl.u32 %v375, 7
    %v377 = vsub.s32 0, %v376
    %v378 = vrot.slane %v77, %v377
    %v379 = vadd.f32 %v374, %v378
    %vm380 = vcmask 293888
    %v381 = vsel %vm380, %v379, 0.0
    %v382 = vrot.slane %v381, 4
    %v383 = vadd.f32 %v381, %v382
    %v384 = vrot.slane %v383, 2
    %v385 = vadd.f32 %v383, %v384
    %v386 = vrot.slane %v385, 1
    %v387 = vadd.f32 %v385, %v386
    %v388 = vrcp.pop 8.0
    %v389 = vmul.f32 %v387, %v388
    %v390 = vsub.f32 %v379, %v389
    %v391 = vmul.f32 %v390, %v390
    %v392 = vsel %vm380, %v391, 0.0
    %v393 = vrot.slane %v392, 4
    %v394 = vadd.f32 %v392, %v393
    %v395 = vrot.slane %v394, 2
    %v396 = vadd.f32 %v394, %v395
    %v397 = vrot.slane %v396, 1
    %v398 = vadd.f32 %v396, %v397
    %v399 = vmul.f32 %v398, %v388
    %v400 = vadd.f32 %v399, 1e-08
    %v401 = vrsqrt.pop %v400
    %v402 = vmul.f32 %v390, %v401
    %v403 = vlaneseq
    %v404 = vshrl.u32 %v403, 7
    %v405 = vsub.s32 3, %v404
    %v406 = vrot.slane %v77, %v405
    %v407 = vmul.f32 %v402, %v406
    %v408 = vlaneseq
    %v409 = vshrl.u32 %v408, 7
    %v410 = vsub.s32 4, %v409
    %v411 = vrot.slane %v77, %v410
    %v412 = vadd.f32 %v407, %v411
    %v413 = vlaneseq
    %v414 = vshrl.u32 %v413, 7
    %v415 = vsub.s32 2, %v414
    %v416 = vrot.slane %v77, %v415
    %v417 = vmul.f32 %v416, %v412
    %v418 = vxor.u32 %v417, 2147483648
    %v419 = vmul.f32 %v418, 1.442695
    %v420 = vpow.pop %v419
    %v421 = vadd.f32 %v420, 1.0
    %v422 = vrcp.pop %v421
    %v423 = vmul.f32 1.0, %v422
    %v424 = vsub.f32 1.0, %v77
    %v425 = vlaneseq
    %v426 = vshrl.u32 %v425, 7
    %v427 = vsub.s32 1, %v426
    %v428 = vrot.slane %v424, %v427
    %v429 = vmul.f32 %v423, %v428
    %v430 = vlaneseq
    %v431 = vshrl.u32 %v430, 7
    %v432 = vsub.s32 1, %v431
    %v433 = vrot.slane %v77, %v432
    %v434 = vadd.f32 %v433, %v429
    %v435 = vmul.f32 %v379, %v434
    %v436 = vlaneseq
    %v437 = vshrl.u32 %v436, 7
    %v438 = vsub.s32 5, %v437
    %v439 = vrot.slane %v77, %v438
    %v440 = vmul.f32 %v435, %v439
    %v441 = vsel %vm380, %v440, 0.0
    %442 = vadd.xlane.f32.xlu0 %v441
    %v443 = vpop.xlane.xlu0 %442
    %445 = vset.pattern.permute.xlu0 0
    %446 = vperm.xlu0 %445, %v77
    %v447 = vpop.permute.xlu0 %446
    %v448 = vlaneseq
    %v449 = vshrl.u32 %v448, 7
    %v450 = vsub.s32 6, %v449
    %v451 = vrot.slane %v447, %v450
    %v453 = vadd.f32 %v443, %v451
    %455 = vset.pattern.permute.xlu0 0
    %456 = vperm.xlu0 %455, %v453
    %v457 = vpop.permute.xlu0 %456
    %v458 = vlaneseq
    %v459 = vand.u32 %v458, 127
    %v460 = vlaneseq
    %v461 = vshrl.u32 %v460, 7
    %v462 = vsub.s32 %v459, %v461
    %v463 = vrot.slane %v457, %v462
    %vm465 = vcmask 57344
    %466 = vst.msk [vmem:[#allocation10] sm:$0x1] %vm465, %v463
    // Predicated region
    $region42: #{tpu_custom_call.1} parent=1 // pred_check
      _
    $region43: #{tpu_custom_call.1} parent=1 // pred_check_branch
      %468 = sbr.rel (0) target = $region45
    $region44: #{tpu_custom_call.1} parent=1 // pred_region
      %s470 = ssub.s32 16, 16
      %471 = vsyncadd [#allocation4], %s470
      %s473 = sshll.u32 [#allocation10], 4
      %s474 = int_to_ptr.vmem [resolvable:$true] %s473
      %476 = dma.vmem_to_hbm [thread:$0]  %s474, 16, %s6, [#allocation4]
    $region45: #{tpu_custom_call.1} parent=1 // pred_fallthru
      _
    // Predicated region
    $region46: #{tpu_custom_call.1} parent=1 // pred_check
      _
    $region47: #{tpu_custom_call.1} parent=1 // pred_check_branch
      %478 = sbr.rel (0) target = $region49
    $region48: #{tpu_custom_call.1} parent=1 // pred_region
      %479 = dma.done [#allocation4], 16
    $region49: #{tpu_custom_call.1} parent=1 // pred_fallthru
      _
    %480 = vsyncpa [#allocation3], 1
    %481 = vsyncpa [#allocation6], 1
    %482 = vsyncpa [#allocation9], 1
    %483 = vsyncpa [#allocation4], 1

</llo_original>
